<compile_context>
chip_gen: v6e
topology: v6e:2x2x1
jax: 0.10.0
libtpu: 0.0.40
codegen_flags: <defaults>
</compile_context>

<pallas_src>
import functools

import jax
import jax.numpy as jnp
from jax.experimental import pallas as pl
from jax.experimental.pallas import tpu as pltpu


def _round_up(a: int, b: int) -> int:
    return ((a + b - 1) // b) * b


# ---------------------------------------------------------------------------
# Kernel 1: streaming row-max over x viewed as (B*C, H*W)
# ---------------------------------------------------------------------------

def _rowmax_kernel(x_ref, o_ref, acc_ref, *, thw, tail_len, mask_tail):
    """Running max over the lane axis of a (TR, THW) tile.

    acc_ref: (TR, 128) f32 per-lane running max. The streaming loop is pure
    VPU (lane-aligned column maxes); the single cross-lane XLU reduce runs
    only in the k == last finalize, off the streaming critical path.
    """
    k = pl.program_id(1)
    nk = pl.num_programs(1)

    @pl.when(k == 0)
    def _init():
        acc_ref[...] = jnp.full_like(acc_ref, -jnp.inf)

    x = x_ref[...].astype(jnp.float32)            # (TR, THW)

    def _update(xv):
        n_full = thw // 128
        rem = thw - n_full * 128
        part = None
        if n_full > 0:
            # Lane-aligned static slices are free vreg selections; jnp.maximum
            # is pure VPU, so the streaming loop never touches the XLU.
            part = xv[:, 0:128]
            for j in range(1, n_full):
                part = jnp.maximum(part, xv[:, j * 128:(j + 1) * 128])
        if rem > 0:
            # Ragged trailing columns (only when THW == HW and HW % 128 != 0,
            # i.e. a single reduction step): small lane reduce, broadcast into
            # every accumulator lane (max is idempotent under duplication).
            tail = jnp.max(xv[:, n_full * 128:], axis=-1, keepdims=True)
            part = tail if part is None else jnp.maximum(part, tail)
        acc_ref[...] = jnp.maximum(acc_ref[...], part)

    if mask_tail:
        # Masking only on the *last* reduction tile; full tiles pay zero extra
        # VPU work (keeps the kernel DMA-bound on v7x).
        @pl.when(k == nk - 1)
        def _tail_tile():
            lane = jax.lax.broadcasted_iota(jnp.int32, x.shape, dimension=1)
            _update(jnp.where(lane < tail_len, x, -jnp.inf))

        @pl.when(k < nk - 1)
        def _full_tile():
            _update(x)
    else:
        _update(x)

    @pl.when(k == nk - 1)
    def _finalize():
        # One 128-wide cross-lane reduce per row block.
        o_ref[...] = jnp.max(acc_ref[...], axis=-1,
                             keepdims=True).astype(o_ref.dtype)


def _vmem_limit_bytes() -> int:
    """Generation-aware scoped-VMEM request (128 MiB v5e/v6e vs 64 MiB v7x)."""
    try:
        cap = int(pltpu.get_tpu_info().vmem_capacity_bytes)
    except Exception:
        cap = 64 * 1024 * 1024          # conservative fallback
    return max(16 * 1024 * 1024, min((cap * 3) // 4, 96 * 1024 * 1024))


def _choose_tiles(n_rows, hw, itemsize, vmem_limit):
    """Tile sizes from layout-padded footprints."""
    sublane = {4: 8, 2: 16, 1: 32}.get(itemsize, 8)

    # Lane tile over HW: full extent when it fits (one contiguous DMA, no tail);
    # otherwise the largest multiple of 128 <= 4096 that divides HW (kills the
    # tail tile); only fall back to a masked tail if no such divisor exists.
    lane_cap = 4096
    if hw <= lane_cap:
        thw = hw
    else:
        thw = 0
        t = (lane_cap // 128) * 128
        while t >= 128:
            if hw % t == 0:
                thw = t
                break
            t -= 128
        if thw == 0:
            thw = (lane_cap // 128) * 128      # masked tail on the last step only
    thw_pad = _round_up(thw, 128)

    # Row tile: VMEM per *padded* row = 2 double-buffered x tiles
    #   + (row, 128) f32 accumulator + double-buffered (row, 1) output
    #   (which pads to 128 lanes).
    per_row = 2 * thw_pad * itemsize + 128 * 4 + 2 * 128 * 4
    usable = max(per_row * sublane, vmem_limit - 4 * 1024 * 1024)
    rows = max(sublane, ((usable // per_row) // sublane) * sublane)

    if rows >= n_rows:
        # Keep >= 2 row blocks when the row count allows so the "parallel"
        # axis can be sharded across TensorCores (v7x has 2 TCs); harmless on
        # single-TC v5e/v6e (one extra ~0.35 us grid step).
        half = _round_up(-(-n_rows // 2), sublane)
        tr = n_rows if half >= n_rows else half
    else:
        tr = rows
    return tr, thw


def _row_max(x2):
    """Per-row max: (N, HW) -> (N, 1) float32, as a Pallas kernel."""
    n_rows, hw = x2.shape
    itemsize = jnp.dtype(x2.dtype).itemsize
    vmem_limit = _vmem_limit_bytes()
    tr, thw = _choose_tiles(n_rows, hw, itemsize, vmem_limit)

    nr = pl.cdiv(n_rows, tr)
    nk = pl.cdiv(hw, thw)
    mask_tail = (thw < hw) and (hw % thw != 0)

    kernel = functools.partial(
        _rowmax_kernel, thw=thw, tail_len=hw % thw, mask_tail=mask_tail)

    cost = pl.CostEstimate(
        flops=n_rows * hw,               # one compare/select per element
        transcendentals=0,
        bytes_accessed=int(n_rows * hw * itemsize + n_rows * 4),
    )

    return pl.pallas_call(
        kernel,
        out_shape=jax.ShapeDtypeStruct((n_rows, 1), jnp.float32),
        grid_spec=pltpu.PrefetchScalarGridSpec(
            num_scalar_prefetch=0,
            grid=(nr, nk),
            in_specs=[
                # Streamed input, double-buffered by the BlockSpec pipeline.
                # (If an xprof dump ever shows exposed DMA with strided tiles,
                # pipeline_mode=pl.Buffered(3) is the next knob.)
                pl.BlockSpec((tr, thw), lambda r, k: (r, k)),
            ],
            out_specs=pl.BlockSpec((tr, 1), lambda r, k: (r, 0)),
            scratch_shapes=[pltpu.VMEM((tr, 128), jnp.float32)],
        ),
        compiler_params=pltpu.CompilerParams(
            dimension_semantics=("parallel", "arbitrary"),
            vmem_limit_bytes=vmem_limit,
        ),
        cost_estimate=cost,
    )(x2)


# ---------------------------------------------------------------------------
# Kernel 2: tiny fully-connected layer (B, C) @ (C, F) + bias
# ---------------------------------------------------------------------------

def _fc_kernel(p_ref, w_ref, b_ref, o_ref):
    o_ref[...] = (
        jnp.dot(p_ref[...], w_ref[...], preferred_element_type=jnp.float32)
        + b_ref[...]
    ).astype(o_ref.dtype)


def _fc(pooled, w_t, b2):
    b = pooled.shape[0]
    f = w_t.shape[1]
    return pl.pallas_call(
        _fc_kernel,
        out_shape=jax.ShapeDtypeStruct((b, f), jnp.float32),
    )(pooled, w_t, b2)


# ---------------------------------------------------------------------------
# Module forward
# ---------------------------------------------------------------------------

def maxpool_fc(x, weight, bias):
    """Forward of _MaxPoolFC: x.amax((-2, -1)) -> Identity -> Linear.

    x: (B, C, H, W); weight: (F, C) PyTorch nn.Linear layout; bias: (F,).
    """
    B, C, H, W = x.shape
    F = weight.shape[0]

    x2 = x.reshape(B * C, H * W)                   # contiguous reshape: free
    pooled = _row_max(x2).reshape(B, C)            # (B, C) f32 row maxes
    return _fc(pooled,
               weight.T.astype(jnp.float32),       # (C, F) lane-dense output
               bias.reshape(1, F).astype(jnp.float32))


if __name__ == "__main__":
    # Shapes consistent with the module: in_features = C = 4, out_features = 8.
    B, C, H, W = 2, 4, 16, 16
    F = 8

    key = jax.random.PRNGKey(0)
    kx, kw, kb = jax.random.split(key, 3)

    x = jax.random.normal(kx, (B, C, H, W), dtype=jnp.float32)

    # Deterministic nn.Linear-style init: U(-1/sqrt(in), 1/sqrt(in))
    bound = 1.0 / (C ** 0.5)
    weight = jax.random.uniform(kw, (F, C), jnp.float32, -bound, bound)
    bias = jax.random.uniform(kb, (F,), jnp.float32, -bound, bound)

    out = jax.block_until_ready(maxpool_fc(x, weight, bias))
    ref = jnp.max(x, axis=(-2, -1)) @ weight.T + bias
    assert out.shape == (B, F)
    assert jnp.allclose(out, ref, atol=1e-5, rtol=1e-5)

    # Extra correctness probe (silent on success): ragged HW (7x7 = 49 lanes,
    # exercises the in-tile remainder path) and a partial row block
    # (B*C = 12 rows -> two 8-row blocks, last one padded).
    x_b = jax.random.normal(kb, (3, C, 7, 7), dtype=jnp.float32)
    out_b = jax.block_until_ready(maxpool_fc(x_b, weight, bias))
    ref_b = jnp.max(x_b, axis=(-2, -1)) @ weight.T + bias
    assert jnp.allclose(out_b, ref_b, atol=1e-5, rtol=1e-5)

    print("KERNEL_OK")
</pallas_src>

<mosaic_0001>
module attributes {stable_mosaic.version = 11 : i64} {
  func.func @_rowmax_kernel(%arg0: i32, %arg1: i32, %arg2: memref<8x256xf32, #tpu.memory_space<vmem>>, %arg3: memref<8x1xf32, #tpu.memory_space<vmem>>, %arg4: memref<8x128xf32, #tpu.memory_space<vmem>>) attributes {dimension_semantics = [#tpu.dimension_semantics<parallel>, #tpu.dimension_semantics<arbitrary>], iteration_bounds = array<i64: 1, 1>, scalar_prefetch = 0 : i64, scratch_operands = 1 : i64, tpu.core_type = #tpu.core_type<tc>, window_params = [{transform_indices = @transform_0, window_bounds = array<i64: 8, 256>}, {transform_indices = @transform_1, window_bounds = array<i64: 8, 1>}]} {
    %c0_i32 = arith.constant 0 : i32
    %0 = arith.cmpi eq, %arg1, %c0_i32 : i32
    %1 = arith.extui %0 : i1 to i32
    %c0_i32_0 = arith.constant 0 : i32
    %2 = arith.cmpi ne, %1, %c0_i32_0 : i32
    scf.if %2 {
      %cst = arith.constant 0xFF800000 : f32
      %13 = vector.broadcast %cst : f32 to vector<8x128xf32>
      %c0_8 = arith.constant 0 : index
      %c0_9 = arith.constant 0 : index
      %14 = vector.load %arg4[%c0_8, %c0_9] : memref<8x128xf32, #tpu.memory_space<vmem>>, vector<8x128xf32>
      tpu.vector_store %arg4[%c0_8, %c0_9], %13 {strides = array<i32>} : memref<8x128xf32, #tpu.memory_space<vmem>>, vector<8x128xf32>,
    } else {
    }
    %c0 = arith.constant 0 : index
    %c0_1 = arith.constant 0 : index
    %3 = vector.load %arg2[%c0, %c0_1] : memref<8x256xf32, #tpu.memory_space<vmem>>, vector<8x256xf32>
    %4 = vector.extract_strided_slice %3 {offsets = [0, 0], sizes = [8, 128], strides = [1, 1]} : vector<8x256xf32> to vector<8x128xf32>
    %5 = vector.extract_strided_slice %3 {offsets = [0, 128], sizes = [8, 128], strides = [1, 1]} : vector<8x256xf32> to vector<8x128xf32>
    %6 = arith.maximumf %4, %5 : vector<8x128xf32>
    %c0_2 = arith.constant 0 : index
    %c0_3 = arith.constant 0 : index
    %7 = vector.load %arg4[%c0_2, %c0_3] : memref<8x128xf32, #tpu.memory_space<vmem>>, vector<8x128xf32>
    %8 = arith.maximumf %7, %6 : vector<8x128xf32>
    %c0_4 = arith.constant 0 : index
    %c0_5 = arith.constant 0 : index
    %9 = vector.load %arg4[%c0_4, %c0_5] : memref<8x128xf32, #tpu.memory_space<vmem>>, vector<8x128xf32>
    tpu.vector_store %arg4[%c0_4, %c0_5], %8 {strides = array<i32>} : memref<8x128xf32, #tpu.memory_space<vmem>>, vector<8x128xf32>,
    %c0_i32_6 = arith.constant 0 : i32
    %10 = arith.cmpi eq, %arg1, %c0_i32_6 : i32
    %11 = arith.extui %10 : i1 to i32
    %c0_i32_7 = arith.constant 0 : i32
    %12 = arith.cmpi ne, %11, %c0_i32_7 : i32
    scf.if %12 {
      %c0_8 = arith.constant 0 : index
      %c0_9 = arith.constant 0 : index
      %13 = vector.load %arg4[%c0_8, %c0_9] : memref<8x128xf32, #tpu.memory_space<vmem>>, vector<8x128xf32>
      %cst = arith.constant dense<0xFF800000> : vector<8xf32>
      %14 = vector.multi_reduction <maximumf>, %13, %cst [1] : vector<8x128xf32> to vector<8xf32>
      %15 = vector.shape_cast %14 : vector<8xf32> to vector<8x1xf32>
      %c0_10 = arith.constant 0 : index
      %c0_11 = arith.constant 0 : index
      %16 = vector.load %arg3[%c0_10, %c0_11] : memref<8x1xf32, #tpu.memory_space<vmem>>, vector<8x1xf32>
      tpu.vector_store %arg3[%c0_10, %c0_11], %15 {strides = array<i32>} : memref<8x1xf32, #tpu.memory_space<vmem>>, vector<8x1xf32>,
    } else {
    }
    return
  }
  func.func @transform_0(%arg0: i32, %arg1: i32) -> (i32, i32) {
    %c0_i32 = arith.constant 0 : i32
    return %arg0, %arg1 : i32, i32
  }
  func.func @transform_1(%arg0: i32, %arg1: i32) -> (i32, i32) {
    %c0_i32 = arith.constant 0 : i32
    %c0_i32_0 = arith.constant 0 : i32
    return %arg0, %c0_i32 : i32, i32
  }
}

</mosaic_0001>

<llo_original>
// kernel: tpu_custom_call.1
$region0: #{tpu_custom_call.1}
  #allocation0 [shape = 'u32[]', space=smem, size = 0x4, offset = 0x4, fixed_abs, tag = 'smem constant byte address 0x4 - core index']
  #allocation1 [shape = 'u32[144,128]{1,0:T(1,128)}', space=vmem, size = 0x12000, scoped, tag = 'internal scratch']
  #allocation2 [shape = 'f32[8,128]{1,0:T(8,128)}', space=vmem, size = 0x1000, scoped, tag = 'scratch operand']
  %s0 = inlined_call_operand.hbm [shape: f32[8,256], index: 0, kind: input, shape index: {}]
  %s1 = inlined_call_operand.vmem [shape: f32[8,1], index: 1, kind: output, shape index: {}]
  %s2 = sld [smem:[#allocation0]]
  $region26: #{tpu_custom_call.1} parent=0
    _
  %s4 = ssub.s32 1, %s2
  %s5 = scalar_select 0, %s4, %s2
  $region1: #{tpu_custom_call.1} parent=0
    #allocation3 [shape = 'u8[8192]{0}', space=vmem, size = 0x2000, scoped, tag = 'input window, operand 0, single buffered']
    #allocation4 [shape = 's32[1]{0}', space=sflag, size = 0x4, scoped, tag = 'scoped memory for tpu_custom_call.1']
    %6 = vsyncpa [#allocation4], 0
    // Predicated region
    $region2: #{tpu_custom_call.1} parent=1 // pred_check
      _
    $region3: #{tpu_custom_call.1} parent=1 // pred_check_branch
      %8 = sbr.rel (0) target = $region5
    $region4: #{tpu_custom_call.1} parent=1 // pred_region
      %s10 = ssub.s32 256, 256
      %11 = vsyncadd [#allocation4], %s10
      %s13 = sshll.u32 [#allocation3], 4
      %s14 = int_to_ptr.vmem [resolvable:$true] %s13
      %16 = dma.hbm_to_vmem [thread:$0]  %s0, 256, %s14, [#allocation4]
    $region5: #{tpu_custom_call.1} parent=1 // pred_fallthru
      _
    // Predicated region
    $region6: #{tpu_custom_call.1} parent=1 // pred_check
      _
    $region7: #{tpu_custom_call.1} parent=1 // pred_check_branch
      %18 = sbr.rel (0) target = $region9
    $region8: #{tpu_custom_call.1} parent=1 // pred_region
      %19 = dma.done [#allocation4], 256
    $region9: #{tpu_custom_call.1} parent=1 // pred_fallthru
      _
    %p20 = scmp.eq.s32.totalorder 0, 0
    // Predicated region
    $region10: #{tpu_custom_call.1} parent=1 // pred_check
      %p21 = pneg %p20
    $region11: #{tpu_custom_call.1} parent=1 // pred_check_branch
      %23 = sbr.rel (%p21) target = $region13
    $region12: #{tpu_custom_call.1} parent=1 // pred_region
      %24 = vst [vmem:[#allocation2] sm:$0xff] -inf
    $region13: #{tpu_custom_call.1} parent=1 // pred_fallthru
      _
    %v25 = vld [vmem:[#allocation3] sm:$0xff]
    %v26 = vld [vmem:[#allocation3 + $0x8] sm:$0xff]
    %v27 = vmax.f32 %v25, %v26
    %v28 = vld [vmem:[#allocation2] sm:$0xff]
    %v29 = vmax.f32 %v28, %v27
    %30 = vst [vmem:[#allocation2] sm:$0xff] %v29
    // Predicated region
    $region14: #{tpu_custom_call.1} parent=1 // pred_check
      %p31 = pneg %p20
    $region15: #{tpu_custom_call.1} parent=1 // pred_check_branch
      %33 = sbr.rel (%p31) target = $region17
    $region16: #{tpu_custom_call.1} parent=1 // pred_region
      %v34 = vld [vmem:[#allocation2] sm:$0xff]
      %35 = vmax.xlane.f32.xlu0 %v34
      %v36 = vpop.xlane.xlu0 %35
      %vm37 = vcmask 7168
      %38 = vst.msk [vmem:[%s1] sm:$0xff] %vm37, %v36
    $region17: #{tpu_custom_call.1} parent=1 // pred_fallthru
      _
    // Predicated region
    $region18: #{tpu_custom_call.1} parent=1 // pred_check
      _
    $region19: #{tpu_custom_call.1} parent=1 // pred_check_branch
      %40 = sbr.rel (0) target = $region21
    $region20: #{tpu_custom_call.1} parent=1 // pred_region
      _
    $region21: #{tpu_custom_call.1} parent=1 // pred_fallthru
      _
    // Predicated region
    $region22: #{tpu_custom_call.1} parent=1 // pred_check
      _
    $region23: #{tpu_custom_call.1} parent=1 // pred_check_branch
      %42 = sbr.rel (0) target = $region25
    $region24: #{tpu_custom_call.1} parent=1 // pred_region
      _
    $region25: #{tpu_custom_call.1} parent=1 // pred_fallthru
      _
    %43 = vsyncpa [#allocation4], 1

</llo_original>
